<compile_context>
chip_gen: v7x
topology: tpu7x:2x2x1
jax: 0.10.0
libtpu: 0.0.40
codegen_flags: <defaults>
</compile_context>

<pallas_src>
import functools

import jax
import jax.numpy as jnp
from jax import lax
from jax.experimental import pallas as pl
from jax.experimental.pallas import tpu as pltpu

LANES = 128      # f32 lane width (fused/output slab width)
GRANULE = 16     # bf16 sublane-pack granule (also covers f32's 8)
BT_MAX = 256     # max batch-tile rows (review: 128-256 sweet spot, v5e-safe)


def _round_up(n, m):
    return ((n + m - 1) // m) * m


def resnet_head_kernel(x_ref, wbc_ref, bbc_ref, w2_ref, b2_ref, mask_ref,
                       out_ref):
    """One batch tile of the fused forward.

    x_ref    (bt, L)     bf16   raw signal (repeat + backbone folded into wbc)
    wbc_ref  (L, 128)    bf16   folded [backbone -> fc | head0] weight
    bbc_ref  (1, 128)    f32    folded bias
    w2_ref   (128, 128)  bf16   zero-padded head[2] weight
    b2_ref   (1, 128)    f32    zero-padded head[2] bias
    mask_ref (1, 128)    f32    1.0 in logits cols [0,NC), else 0.0
    out_ref  (bt, 128)   f32    [logits | normalized emb | 0]
    """
    # MXU pass 1: backbone + fc + head[0] in one (bt,L)@(L,128), f32 accumulate.
    fused = jnp.dot(x_ref[...], wbc_ref[...],
                    preferred_element_type=jnp.float32) + bbc_ref[...]

    # head[1] ReLU (f32, VPU) then MXU pass 2 with bf16 operands.  w2_ref rows
    # outside the hidden columns are zero, so the ReLU'd logits columns don't
    # leak into the embedding; emb is exactly zero outside [NC, NC+dim).
    h = jnp.maximum(fused, 0.0)
    emb = jnp.dot(h.astype(w2_ref.dtype), w2_ref[...],
                  preferred_element_type=jnp.float32) + b2_ref[...]

    # F.normalize(emb, p=2, dim=1, eps=1e-12): padded columns are exactly zero,
    # so the full-row reduction equals the true squared norm.  rsqrt -> EUP slot.
    sumsq = jnp.sum(emb * emb, axis=1, keepdims=True)
    scale = lax.rsqrt(jnp.maximum(sumsq, 1e-24))

    # Lane-dense store: logits where mask==1, normalized emb elsewhere
    # (emb*scale is zero in the logits columns, fused*mask is zero elsewhere).
    out_ref[...] = fused * mask_ref[...] + emb * scale


def pack_params(params, signal_len, out_channels, num_classes, dim):
    """One-time algebraic repack of the torch-layout parameters."""
    wb, bb, wf, bf, w1, b1, w2, b2 = params
    assert num_classes + out_channels <= LANES, "fused width exceeds 128 lanes"
    assert num_classes + dim <= LANES, "logits+emb exceed 128 lanes"

    # Fold the 32x channel repeat into the backbone weight:
    #   flatten(x.repeat(1,32,1)) @ wb == x @ wb.reshape(32, L, C).sum(0)
    wb_eff = wb.reshape(32, signal_len, out_channels).sum(axis=0)

    # fc and head[0] fused along N, zero-padded to 128 lanes.
    wcat = jnp.zeros((out_channels, LANES), jnp.float32)
    wcat = wcat.at[:, :num_classes].set(wf)
    wcat = wcat.at[:, num_classes:num_classes + out_channels].set(w1)
    bcat = jnp.zeros((1, LANES), jnp.float32)
    bcat = bcat.at[:, :num_classes].set(bf)
    bcat = bcat.at[:, num_classes:num_classes + out_channels].set(b1)

    # Fold the stand-in Linear backbone into the fused head weight so the
    # kernel needs only one first-stage matmul.
    # TODO(synk): remove both folds when the real base_encoder (ResNet-1D /
    # TransUnet) replaces the Linear stand-in.
    wbc = wb_eff @ wcat                     # (L, 128)
    bbc = bb @ wcat + bcat                  # (1, 128)

    # head[2] weight zero-padded to (128,128): rows aligned with the hidden
    # columns of `fused`, cols place the embedding at [NC, NC+dim).
    w2p = jnp.zeros((LANES, LANES), jnp.float32)
    w2p = w2p.at[num_classes:num_classes + out_channels,
                 num_classes:num_classes + dim].set(w2)
    b2p = jnp.zeros((1, LANES), jnp.float32)
    b2p = b2p.at[:, num_classes:num_classes + dim].set(b2)

    # Precomputed 0/1 logits-column mask (replaces per-step iota + where).
    mask = (jnp.arange(LANES) < num_classes).astype(jnp.float32)[None, :]

    # bf16 MXU operands; biases / mask stay f32 (elementwise math stays f32).
    return (wbc.astype(jnp.bfloat16), bbc.astype(jnp.float32),
            w2p.astype(jnp.bfloat16), b2p.astype(jnp.float32), mask)


@functools.partial(jax.jit, static_argnames=("num_classes", "dim"))
def resnet_forward(x, packed, num_classes, dim):
    """x: (B, 1, L) signal.  Returns (logits (B, NC), normalized emb (B, dim))
    — the non-BASELINE branch of ResNet.forward."""
    # TODO(synk): only the non-BASELINE branch is implemented; the BASELINE
    # branch needs the external TransUnet backbone/CONFIGS.
    wbc, bbc, w2p, b2p, mask = packed
    B, _, L = x.shape

    # Batch tiling: tiles of up to BT_MAX rows; for batches that fill more
    # than one max tile, guarantee >=2 grid steps so v7x's 2 TCs both work.
    b_min = _round_up(B, GRANULE)
    if b_min <= BT_MAX:
        bt = b_min                                   # single step, minimal padding
    else:
        bt = min(BT_MAX, _round_up(-(-b_min // 2), GRANULE))
    b_pad = _round_up(b_min, bt)
    grid = (b_pad // bt,)

    # No materialized repeat: raw (B, L) signal, padded batch rows are zero.
    x2d = jnp.pad(x[:, 0, :].astype(jnp.float32),
                  ((0, b_pad - B), (0, 0))).astype(jnp.bfloat16)

    flops_per_step = 2 * bt * (L * LANES + LANES * LANES)
    cost = pl.CostEstimate(
        flops=flops_per_step * grid[0],
        transcendentals=b_pad,                       # one rsqrt per row
        bytes_accessed=(2 * b_pad * L                       # bf16 x
                        + 2 * (L * LANES + LANES * LANES)   # bf16 weights
                        + 4 * 3 * LANES                     # f32 biases + mask
                        + 4 * b_pad * LANES),               # f32 output slab
    )

    out = pl.pallas_call(
        resnet_head_kernel,
        out_shape=jax.ShapeDtypeStruct((b_pad, LANES), jnp.float32),
        grid=grid,
        in_specs=[
            pl.BlockSpec((bt, L), lambda i: (i, 0)),            # x tile
            pl.BlockSpec((L, LANES), lambda i: (0, 0)),          # wbc
            pl.BlockSpec((1, LANES), lambda i: (0, 0)),          # bbc
            pl.BlockSpec((LANES, LANES), lambda i: (0, 0)),      # w2 padded
            pl.BlockSpec((1, LANES), lambda i: (0, 0)),          # b2 padded
            pl.BlockSpec((1, LANES), lambda i: (0, 0)),          # logits mask
        ],
        out_specs=pl.BlockSpec((bt, LANES), lambda i: (i, 0)),
        compiler_params=pltpu.CompilerParams(
            dimension_semantics=("parallel",)),
        cost_estimate=cost,
    )(x2d, wbc, bbc, w2p, b2p, mask)

    logits = out[:B, :num_classes]
    emb_n = out[:B, num_classes:num_classes + dim]
    return logits, emb_n


def init_params(key, in_features, out_channels, num_classes, dim):
    """Deterministic synthetic parameters in torch-equivalent layout.

    Weights are stored already transposed to (fan_in, fan_out) so the math is
    x @ W + b, matching torch.nn.Linear's x @ W.T + b semantics."""
    ks = jax.random.split(key, 8)

    def w(k, fi, fo):
        return (jax.random.normal(k, (fi, fo), jnp.float32)
                * (1.0 / jnp.sqrt(jnp.float32(fi))))

    def b(k, fo):
        return jax.random.normal(k, (1, fo), jnp.float32) * 0.01

    wb = w(ks[0], in_features, out_channels)     # stand-in backbone projection
    bb = b(ks[1], out_channels)
    wf = w(ks[2], out_channels, num_classes)     # self.fc
    bf = b(ks[3], num_classes)
    w1 = w(ks[4], out_channels, out_channels)    # head[0]
    b1 = b(ks[5], out_channels)
    w2 = w(ks[6], out_channels, dim)             # head[2]
    b2 = b(ks[7], dim)
    return (wb, bb, wf, bf, w1, b1, w2, b2)


def reference_forward(x, params):
    """Plain-jnp transcription of the original (unfused) module for checking."""
    wb, bb, wf, bf, w1, b1, w2, b2 = params
    B = x.shape[0]
    x_rep = jnp.tile(x, (1, 32, 1))                       # x.repeat(1, 32, 1)
    feat = x_rep.reshape(B, -1).astype(jnp.float32) @ wb + bb
    logits = feat @ wf + bf
    h = jnp.maximum(feat @ w1 + b1, 0.0)
    emb = h @ w2 + b2
    norm = jnp.sqrt(jnp.sum(emb * emb, axis=1, keepdims=True))
    return logits, emb / jnp.maximum(norm, 1e-12)


if __name__ == "__main__":
    key = jax.random.PRNGKey(0)
    kx, kp = jax.random.split(key)

    B, L = 2, 16                    # small signal: batch=2, length=16, 1 channel
    out_channels = 32               # backbone.out_channels
    num_classes = 8
    dim = 16

    x = jax.random.normal(kx, (B, 1, L), jnp.float32)
    params = init_params(kp, 32 * L, out_channels, num_classes, dim)
    packed = pack_params(params, L, out_channels, num_classes, dim)

    logits, emb = resnet_forward(x, packed, num_classes, dim)
    jax.block_until_ready((logits, emb))

    assert logits.shape == (B, num_classes)
    assert emb.shape == (B, dim)
    # embeddings are L2-normalized rows
    assert bool(jnp.all(jnp.abs(jnp.sum(emb * emb, axis=1) - 1.0) < 1e-3))

    # matches the unfused f32 reference (tolerance covers bf16 MXU operands)
    ref_logits, ref_emb = reference_forward(x, params)
    assert bool(jnp.allclose(logits, ref_logits, rtol=5e-2, atol=5e-2))
    assert bool(jnp.allclose(emb, ref_emb, rtol=5e-2, atol=5e-2))
    print("KERNEL_OK")
</pallas_src>

<mosaic_0001>
module attributes {stable_mosaic.version = 11 : i64} {
  func.func @resnet_head_kernel(%arg0: i32, %arg1: memref<16x16xbf16, #tpu.memory_space<vmem>>, %arg2: memref<16x128xbf16, #tpu.memory_space<vmem>>, %arg3: memref<1x128xf32, #tpu.memory_space<vmem>>, %arg4: memref<128x128xbf16, #tpu.memory_space<vmem>>, %arg5: memref<1x128xf32, #tpu.memory_space<vmem>>, %arg6: memref<1x128xf32, #tpu.memory_space<vmem>>, %arg7: memref<16x128xf32, #tpu.memory_space<vmem>>) attributes {dimension_semantics = [#tpu.dimension_semantics<parallel>], iteration_bounds = array<i64: 1>, scalar_prefetch = 0 : i64, scratch_operands = 0 : i64, tpu.core_type = #tpu.core_type<tc>, window_params = [{transform_indices = @transform_0, window_bounds = array<i64: 16, 16>}, {pipeline_mode = #tpu.pipeline_mode<synchronous>, transform_indices = @transform_1, window_bounds = array<i64: 16, 128>}, {pipeline_mode = #tpu.pipeline_mode<synchronous>, transform_indices = @transform_2, window_bounds = array<i64: 1, 128>}, {pipeline_mode = #tpu.pipeline_mode<synchronous>, transform_indices = @transform_3, window_bounds = array<i64: 128, 128>}, {pipeline_mode = #tpu.pipeline_mode<synchronous>, transform_indices = @transform_4, window_bounds = array<i64: 1, 128>}, {pipeline_mode = #tpu.pipeline_mode<synchronous>, transform_indices = @transform_5, window_bounds = array<i64: 1, 128>}, {transform_indices = @transform_6, window_bounds = array<i64: 16, 128>}]} {
    %c0 = arith.constant 0 : index
    %c0_0 = arith.constant 0 : index
    %0 = vector.load %arg1[%c0, %c0_0] : memref<16x16xbf16, #tpu.memory_space<vmem>>, vector<16x16xbf16>
    %c0_1 = arith.constant 0 : index
    %c0_2 = arith.constant 0 : index
    %1 = vector.load %arg2[%c0_1, %c0_2] : memref<16x128xbf16, #tpu.memory_space<vmem>>, vector<16x128xbf16>
    %cst = arith.constant dense<0.000000e+00> : vector<16x128xf32>
    %2 = tpu.matmul %0, %1, %cst {dimension_numbers = #tpu.dot_dimension_numbers<[1], [0], [0], [1], [0, 0, 1, 1], [], []>} : vector<16x16xbf16>, vector<16x128xbf16>, vector<16x128xf32> -> vector<16x128xf32>
    %c0_3 = arith.constant 0 : index
    %c0_4 = arith.constant 0 : index
    %3 = vector.load %arg3[%c0_3, %c0_4] : memref<1x128xf32, #tpu.memory_space<vmem>>, vector<1x128xf32>
    %4 = vector.broadcast %3 : vector<1x128xf32> to vector<16x128xf32>
    %5 = arith.addf %2, %4 : vector<16x128xf32>
    %cst_5 = arith.constant 0.000000e+00 : f32
    %6 = vector.broadcast %cst_5 : f32 to vector<16x128xf32>
    %7 = arith.maximumf %5, %6 : vector<16x128xf32>
    %8 = arith.truncf %7 : vector<16x128xf32> to vector<16x128xbf16>
    %c0_6 = arith.constant 0 : index
    %c0_7 = arith.constant 0 : index
    %9 = vector.load %arg4[%c0_6, %c0_7] : memref<128x128xbf16, #tpu.memory_space<vmem>>, vector<128x128xbf16>
    %cst_8 = arith.constant dense<0.000000e+00> : vector<16x128xf32>
    %10 = tpu.matmul %8, %9, %cst_8 {dimension_numbers = #tpu.dot_dimension_numbers<[1], [0], [0], [1], [0, 0, 1, 1], [], []>} : vector<16x128xbf16>, vector<128x128xbf16>, vector<16x128xf32> -> vector<16x128xf32>
    %c0_9 = arith.constant 0 : index
    %c0_10 = arith.constant 0 : index
    %11 = vector.load %arg5[%c0_9, %c0_10] : memref<1x128xf32, #tpu.memory_space<vmem>>, vector<1x128xf32>
    %12 = vector.broadcast %11 : vector<1x128xf32> to vector<16x128xf32>
    %13 = arith.addf %10, %12 : vector<16x128xf32>
    %14 = arith.mulf %13, %13 : vector<16x128xf32>
    %cst_11 = arith.constant dense<0.000000e+00> : vector<16xf32>
    %15 = vector.multi_reduction <add>, %14, %cst_11 [1] : vector<16x128xf32> to vector<16xf32>
    %16 = vector.shape_cast %15 : vector<16xf32> to vector<16x1xf32>
    %cst_12 = arith.constant 1.000000e-24 : f32
    %17 = vector.broadcast %cst_12 : f32 to vector<16x1xf32>
    %18 = arith.maximumf %16, %17 : vector<16x1xf32>
    %19 = math.rsqrt %18 : vector<16x1xf32>
    %c0_13 = arith.constant 0 : index
    %c0_14 = arith.constant 0 : index
    %20 = vector.load %arg6[%c0_13, %c0_14] : memref<1x128xf32, #tpu.memory_space<vmem>>, vector<1x128xf32>
    %21 = vector.broadcast %20 : vector<1x128xf32> to vector<16x128xf32>
    %22 = arith.mulf %5, %21 : vector<16x128xf32>
    %23 = vector.broadcast %19 : vector<16x1xf32> to vector<16x128xf32>
    %24 = arith.mulf %13, %23 : vector<16x128xf32>
    %25 = arith.addf %22, %24 : vector<16x128xf32>
    %c0_15 = arith.constant 0 : index
    %c0_16 = arith.constant 0 : index
    %26 = vector.load %arg7[%c0_15, %c0_16] : memref<16x128xf32, #tpu.memory_space<vmem>>, vector<16x128xf32>
    tpu.vector_store %arg7[%c0_15, %c0_16], %25 {strides = array<i32>} : memref<16x128xf32, #tpu.memory_space<vmem>>, vector<16x128xf32>,
    return
  }
  func.func @transform_0(%arg0: i32) -> (i32, i32) {
    %c0_i32 = arith.constant 0 : i32
    %c0_i32_0 = arith.constant 0 : i32
    return %arg0, %c0_i32 : i32, i32
  }
  func.func @transform_1(%arg0: i32) -> (i32, i32) {
    %c0_i32 = arith.constant 0 : i32
    %c0_i32_0 = arith.constant 0 : i32
    %c0_i32_1 = arith.constant 0 : i32
    return %c0_i32, %c0_i32_0 : i32, i32
  }
  func.func @transform_2(%arg0: i32) -> (i32, i32) {
    %c0_i32 = arith.constant 0 : i32
    %c0_i32_0 = arith.constant 0 : i32
    %c0_i32_1 = arith.constant 0 : i32
    return %c0_i32, %c0_i32_0 : i32, i32
  }
  func.func @transform_3(%arg0: i32) -> (i32, i32) {
    %c0_i32 = arith.constant 0 : i32
    %c0_i32_0 = arith.constant 0 : i32
    %c0_i32_1 = arith.constant 0 : i32
    return %c0_i32, %c0_i32_0 : i32, i32
  }
  func.func @transform_4(%arg0: i32) -> (i32, i32) {
    %c0_i32 = arith.constant 0 : i32
    %c0_i32_0 = arith.constant 0 : i32
    %c0_i32_1 = arith.constant 0 : i32
    return %c0_i32, %c0_i32_0 : i32, i32
  }
  func.func @transform_5(%arg0: i32) -> (i32, i32) {
    %c0_i32 = arith.constant 0 : i32
    %c0_i32_0 = arith.constant 0 : i32
    %c0_i32_1 = arith.constant 0 : i32
    return %c0_i32, %c0_i32_0 : i32, i32
  }
  func.func @transform_6(%arg0: i32) -> (i32, i32) {
    %c0_i32 = arith.constant 0 : i32
    %c0_i32_0 = arith.constant 0 : i32
    return %arg0, %c0_i32 : i32, i32
  }
}

</mosaic_0001>

<llo_original>
// kernel: resnet_forward.1
$region0: #{resnet_forward.1}
  #allocation0 [shape = 'u32[]', space=smem, size = 0x4, offset = 0x4, fixed_abs, tag = 'smem constant byte address 0x4 - core index']
  #allocation1 [shape = 'u32[144,128]{1,0:T(1,128)}', space=vmem, size = 0x12000, scoped, tag = 'internal scratch']
  %s0 = inlined_call_operand.vmem [shape: bf16[16,16], index: 0, kind: input, shape index: {}]
  %s1 = inlined_call_operand.vmem [shape: bf16[16,128], index: 1, kind: input, shape index: {}]
  %s2 = inlined_call_operand.vmem [shape: f32[1,128], index: 2, kind: input, shape index: {}]
  %s3 = inlined_call_operand.hbm [shape: bf16[128,128], index: 3, kind: input, shape index: {}]
  %s4 = inlined_call_operand.vmem [shape: f32[1,128], index: 4, kind: input, shape index: {}]
  %s5 = inlined_call_operand.vmem [shape: f32[1,128], index: 5, kind: input, shape index: {}]
  %s6 = inlined_call_operand.vmem [shape: f32[16,128], index: 6, kind: output, shape index: {}]
  %s7 = sld [smem:[#allocation0]]
  $region38: #{resnet_forward.1} parent=0
    _
  %s9 = ssub.s32 1, %s7
  %s10 = scalar_select 0, %s9, %s7
  $region1: #{resnet_forward.1} parent=0
    #allocation2 [shape = 'u8[32768]{0}', space=vmem, size = 0x8000, scoped, tag = 'input window, operand 3, single buffered']
    #allocation3 [shape = 's32[1]{0}', space=sflag, size = 0x4, scoped, tag = 'scoped memory for resnet_forward.1']
    %11 = vsyncpa [#allocation3], 0
    // Predicated region
    $region2: #{resnet_forward.1} parent=1 // pred_check
      _
    $region3: #{resnet_forward.1} parent=1 // pred_check_branch
      %13 = sbr.rel (0) target = $region5
    $region4: #{resnet_forward.1} parent=1 // pred_region
      _
    $region5: #{resnet_forward.1} parent=1 // pred_fallthru
      _
    // Predicated region
    $region6: #{resnet_forward.1} parent=1 // pred_check
      _
    $region7: #{resnet_forward.1} parent=1 // pred_check_branch
      %15 = sbr.rel (0) target = $region9
    $region8: #{resnet_forward.1} parent=1 // pred_region
      _
    $region9: #{resnet_forward.1} parent=1 // pred_fallthru
      _
    // Predicated region
    $region10: #{resnet_forward.1} parent=1 // pred_check
      _
    $region11: #{resnet_forward.1} parent=1 // pred_check_branch
      %17 = sbr.rel (0) target = $region13
    $region12: #{resnet_forward.1} parent=1 // pred_region
      _
    $region13: #{resnet_forward.1} parent=1 // pred_fallthru
      _
    // Predicated region
    $region14: #{resnet_forward.1} parent=1 // pred_check
      _
    $region15: #{resnet_forward.1} parent=1 // pred_check_branch
      %19 = sbr.rel (0) target = $region17
    $region16: #{resnet_forward.1} parent=1 // pred_region
      %s21 = ssub.s32 1024, 1024
      %22 = vsyncadd [#allocation3], %s21
      %s23 = sshll.u32 [#allocation2], 4
      %s24 = int_to_ptr.vmem [resolvable:$true] %s23
      %29 = dma.hbm_to_vmem [thread:$0]  %s3, 1024, %s24, [#allocation3], 64, 64, 4
    $region17: #{resnet_forward.1} parent=1 // pred_fallthru
      _
    // Predicated region
    $region18: #{resnet_forward.1} parent=1 // pred_check
      _
    $region19: #{resnet_forward.1} parent=1 // pred_check_branch
      %31 = sbr.rel (0) target = $region21
    $region20: #{resnet_forward.1} parent=1 // pred_region
      _
    $region21: #{resnet_forward.1} parent=1 // pred_fallthru
      _
    // Predicated region
    $region22: #{resnet_forward.1} parent=1 // pred_check
      _
    $region23: #{resnet_forward.1} parent=1 // pred_check_branch
      %33 = sbr.rel (0) target = $region25
    $region24: #{resnet_forward.1} parent=1 // pred_region
      _
    $region25: #{resnet_forward.1} parent=1 // pred_fallthru
      _
    // Predicated region
    $region26: #{resnet_forward.1} parent=1 // pred_check
      _
    $region27: #{resnet_forward.1} parent=1 // pred_check_branch
      %35 = sbr.rel (0) target = $region29
    $region28: #{resnet_forward.1} parent=1 // pred_region
      %36 = dma.done [#allocation3], 1024
    $region29: #{resnet_forward.1} parent=1 // pred_fallthru
      _
    %v38 = vld [vmem:[%s0] sm:$0xf]
    %v39 = vld [vmem:[%s0 + $0x4] sm:$0xf]
    %v40 = vld [vmem:[%s1] sm:$0xf]
    %v41 = vld [vmem:[%s1 + $0x4] sm:$0xf]
    %v42 = vld [vmem:[%s2] sm:$0x1]
    %v44 = vlaneseq
    %v45 = vshrl.u32 %v44, 7
    %v46 = vsub.s32 0, %v45
    %v47 = vrot.slane %v42, %v46
    %v51 = vunpack.c.l.b16 %v38
    %v52 = vunpack.c.l.b16 %v39
    %v53 = vpack.c.b16 %v52, %v51
    %v56 = vunpack.c.l.b16 %v40
    %v57 = vunpack.c.l.b16 %v41
    %v58 = vpack.c.b16 %v57, %v56
    %vm60 = vcmask 130048
    %v62 = vsel %vm60, %v53, 0
    %64 = vmatprep.subr.bf16.mxu0 0
    %65 = vmatpush1.bf16.msra.mxu0 %v58
    %66 = vmatprep.subr.bf16.mxu0 0
    %67 = vmatpush1.bf16.msra.mxu0 0
    %68 = vmatprep.subr.bf16.mxu0 0
    %69 = vmatpush1.bf16.msra.mxu0 0
    %70 = vmatprep.subr.bf16.mxu0 0
    %71 = vmatpush1.bf16.msra.mxu0 0
    %72 = vmatprep.subr.bf16.mxu0 0
    %73 = vmatpush1.bf16.msra.mxu0 0
    %74 = vmatprep.subr.bf16.mxu0 0
    %75 = vmatpush1.bf16.msra.mxu0 0
    %76 = vmatprep.subr.bf16.mxu0 0
    %77 = vmatpush1.bf16.msra.mxu0 0
    %78 = vmatprep.subr.bf16.mxu0 0
    %79 = vmatpush1.bf16.msra.mxu0 0
    %80 = vmatprep.subr.bf16.mxu0 0
    %81 = vmatpush1.bf16.msra.mxu0 0
    %82 = vmatprep.subr.bf16.mxu0 0
    %83 = vmatpush1.bf16.msra.mxu0 0
    %84 = vmatprep.subr.bf16.mxu0 0
    %85 = vmatpush1.bf16.msra.mxu0 0
    %86 = vmatprep.subr.bf16.mxu0 0
    %87 = vmatpush1.bf16.msra.mxu0 0
    %88 = vmatprep.subr.bf16.mxu0 0
    %89 = vmatpush1.bf16.msra.mxu0 0
    %90 = vmatprep.subr.bf16.mxu0 0
    %91 = vmatpush1.bf16.msra.mxu0 0
    %92 = vmatprep.subr.bf16.mxu0 0
    %93 = vmatpush1.bf16.msra.mxu0 0
    %94 = vmatprep.subr.bf16.mxu0 0
    %95 = vmatpush1.bf16.msra.mxu0 0
    %96 = vmatprep.mubr.bf16.mxu0 0
    %97 = vmatmul.mubr.bf16.gmra.mrb[0].mxu0 %v62
    %v98 = vpop.f32.mrb[0].mxu0
    %v99 = vadd.f32 %v47, %v98
    %v100 = vpop.f32.mrb[0].mxu0
    %v101 = vpop.f32.mrb[0].mxu0
    %v102 = vadd.f32 %v47, %v101
    %v103 = vpop.f32.mrb[0].mxu0
    %104 = vdwg.mxu0
    %v105 = vmax.f32 %v99, 0.0
    %v106 = vmax.f32 %v102, 0.0
    %v107 = vpack.c.bf16 %v106, %v105
    %v108 = vld [vmem:[#allocation2] sm:$0xf]
    %v109 = vld [vmem:[#allocation2 + $0x4] sm:$0xf]
    %v110 = vld [vmem:[#allocation2 + $0x8] sm:$0xf]
    %v111 = vld [vmem:[#allocation2 + $0xc] sm:$0xf]
    %v112 = vld [vmem:[#allocation2 + $0x10] sm:$0xf]
    %v113 = vld [vmem:[#allocation2 + $0x14] sm:$0xf]
    %v114 = vld [vmem:[#allocation2 + $0x18] sm:$0xf]
    %v115 = vld [vmem:[#allocation2 + $0x1c] sm:$0xf]
    %v116 = vld [vmem:[#allocation2 + $0x20] sm:$0xf]
    %v117 = vld [vmem:[#allocation2 + $0x24] sm:$0xf]
    %v118 = vld [vmem:[#allocation2 + $0x28] sm:$0xf]
    %v119 = vld [vmem:[#allocation2 + $0x2c] sm:$0xf]
    %v120 = vld [vmem:[#allocation2 + $0x30] sm:$0xf]
    %v121 = vld [vmem:[#allocation2 + $0x34] sm:$0xf]
    %v122 = vld [vmem:[#allocation2 + $0x38] sm:$0xf]
    %v123 = vld [vmem:[#allocation2 + $0x3c] sm:$0xf]
    %v124 = vld [vmem:[%s4] sm:$0x1]
    %v126 = vlaneseq
    %v127 = vshrl.u32 %v126, 7
    %v128 = vsub.s32 0, %v127
    %v129 = vrot.slane %v124, %v128
    %v147 = vunpack.c.l.b16 %v108
    %v148 = vunpack.c.l.b16 %v109
    %v149 = vunpack.c.l.b16 %v110
    %v150 = vunpack.c.l.b16 %v111
    %v151 = vunpack.c.l.b16 %v112
    %v152 = vunpack.c.l.b16 %v113
    %v153 = vunpack.c.l.b16 %v114
    %v154 = vunpack.c.l.b16 %v115
    %v155 = vunpack.c.l.b16 %v116
    %v156 = vunpack.c.l.b16 %v117
    %v157 = vunpack.c.l.b16 %v118
    %v158 = vunpack.c.l.b16 %v119
    %v159 = vunpack.c.l.b16 %v120
    %v160 = vunpack.c.l.b16 %v121
    %v161 = vunpack.c.l.b16 %v122
    %v162 = vunpack.c.l.b16 %v123
    %v163 = vpack.c.b16 %v148, %v147
    %v164 = vpack.c.b16 %v150, %v149
    %v165 = vpack.c.b16 %v152, %v151
    %v166 = vpack.c.b16 %v154, %v153
    %v167 = vpack.c.b16 %v156, %v155
    %v168 = vpack.c.b16 %v158, %v157
    %v169 = vpack.c.b16 %v160, %v159
    %v170 = vpack.c.b16 %v162, %v161
    %179 = vmatprep.subr.bf16.mxu0 0
    %180 = vmatpush1.bf16.msra.mxu0 %v163
    %181 = vmatprep.subr.bf16.mxu0 0
    %182 = vmatpush1.bf16.msra.mxu0 %v164
    %183 = vmatprep.subr.bf16.mxu0 0
    %184 = vmatpush1.bf16.msra.mxu0 %v165
    %185 = vmatprep.subr.bf16.mxu0 0
    %186 = vmatpush1.bf16.msra.mxu0 %v166
    %187 = vmatprep.subr.bf16.mxu0 0
    %188 = vmatpush1.bf16.msra.mxu0 %v167
    %189 = vmatprep.subr.bf16.mxu0 0
    %190 = vmatpush1.bf16.msra.mxu0 %v168
    %191 = vmatprep.subr.bf16.mxu0 0
    %192 = vmatpush1.bf16.msra.mxu0 %v169
    %193 = vmatprep.subr.bf16.mxu0 0
    %194 = vmatpush1.bf16.msra.mxu0 %v170
    %195 = vmatprep.subr.bf16.mxu0 0
    %196 = vmatpush1.bf16.msra.mxu0 0
    %197 = vmatprep.subr.bf16.mxu0 0
    %198 = vmatpush1.bf16.msra.mxu0 0
    %199 = vmatprep.subr.bf16.mxu0 0
    %200 = vmatpush1.bf16.msra.mxu0 0
    %201 = vmatprep.subr.bf16.mxu0 0
    %202 = vmatpush1.bf16.msra.mxu0 0
    %203 = vmatprep.subr.bf16.mxu0 0
    %204 = vmatpush1.bf16.msra.mxu0 0
    %205 = vmatprep.subr.bf16.mxu0 0
    %206 = vmatpush1.bf16.msra.mxu0 0
    %207 = vmatprep.subr.bf16.mxu0 0
    %208 = vmatpush1.bf16.msra.mxu0 0
    %209 = vmatprep.subr.bf16.mxu0 0
    %210 = vmatpush1.bf16.msra.mxu0 0
    %211 = vmatprep.mubr.bf16.mxu0 0
    %212 = vmatmul.mubr.bf16.gmra.mrb[0].mxu0 %v107
    %v213 = vpop.f32.mrb[0].mxu0
    %v214 = vadd.f32 %v129, %v213
    %v215 = vpop.f32.mrb[0].mxu0
    %v216 = vpop.f32.mrb[0].mxu0
    %v217 = vadd.f32 %v129, %v216
    %v218 = vpop.f32.mrb[0].mxu0
    %219 = vdwg.mxu0
    %v220 = vmul.f32 %v214, %v214
    %v221 = vmul.f32 %v217, %v217
    %222 = vadd.xlane.f32.xlu0 %v220
    %v223 = vpop.xlane.xlu0 %222
    %224 = vadd.xlane.f32.xlu0 %v221
    %v225 = vpop.xlane.xlu0 %224
    %v226 = vmax.f32 %v223, 1e-24
    %v227 = vmax.f32 %v225, 1e-24
    %v228 = vrsqrt.pop %v226
    %v229 = vrsqrt.pop %v227
    %v230 = vld [vmem:[%s5] sm:$0x1]
    %v232 = vlaneseq
    %v233 = vshrl.u32 %v232, 7
    %v234 = vsub.s32 0, %v233
    %v235 = vrot.slane %v230, %v234
    %v237 = vmul.f32 %v99, %v235
    %v238 = vmul.f32 %v102, %v235
    %v239 = vmul.f32 %v214, %v228
    %v240 = vmul.f32 %v217, %v229
    %v241 = vadd.f32 %v237, %v239
    %v242 = vadd.f32 %v238, %v240
    %243 = vst [vmem:[%s6] sm:$0xff] %v241
    %244 = vst [vmem:[%s6 + $0x8] sm:$0xff] %v242
    // Predicated region
    $region30: #{resnet_forward.1} parent=1 // pred_check
      _
    $region31: #{resnet_forward.1} parent=1 // pred_check_branch
      %246 = sbr.rel (0) target = $region33
    $region32: #{resnet_forward.1} parent=1 // pred_region
      _
    $region33: #{resnet_forward.1} parent=1 // pred_fallthru
      _
    // Predicated region
    $region34: #{resnet_forward.1} parent=1 // pred_check
      _
    $region35: #{resnet_forward.1} parent=1 // pred_check_branch
      %248 = sbr.rel (0) target = $region37
    $region36: #{resnet_forward.1} parent=1 // pred_region
      _
    $region37: #{resnet_forward.1} parent=1 // pred_fallthru
      _
    %249 = vsyncpa [#allocation3], 1

</llo_original>
